<compile_context>
chip_gen: v5e
topology: v5e:2x2
jax: 0.10.0
libtpu: 0.0.40
codegen_flags: <defaults>
</compile_context>

<pallas_src>
import jax
import jax.numpy as jnp
from jax.experimental import pallas as pl
from jax.experimental.pallas import tpu as pltpu


# ---------------------------------------------------------------------------
# Primary path: zero-DMA aliased pass-through (kernel moves zero bytes).
# ---------------------------------------------------------------------------
def _touch_kernel(x_ref, o_ref):
    # Reshape carries no arithmetic and no data movement.  Both refs are raw
    # HBM (pl.ANY) and the output is aliased onto the input, so there is
    # nothing to copy; touch() just pins a read+write dependency on the
    # aliased output so the call is well-formed and ordered.
    del x_ref
    pltpu.touch(o_ref)


def _alias_passthrough(x):
    return pl.pallas_call(
        _touch_kernel,
        out_shape=jax.ShapeDtypeStruct(x.shape, x.dtype),
        in_specs=[pl.BlockSpec(memory_space=pl.ANY)],
        out_specs=pl.BlockSpec(memory_space=pl.ANY),
        input_output_aliases={0: 0},
        compiler_params=pltpu.CompilerParams(has_side_effects=True),
    )(x)


# ---------------------------------------------------------------------------
# Fallback path: streaming identity copy (only used if the zero-DMA path
# fails to lower on the current jax/libtpu).
# ---------------------------------------------------------------------------
def _copy_kernel(x_ref, o_ref):
    o_ref[...] = x_ref[...]


_SMALL_BYTES = 512 << 10        # below this: single full-array block, no grid
_TARGET_TILE_BYTES = 4 << 20    # ~4 MiB/pipeline buffer: 2 arrays x 2 bufs x
                                # 4 MiB = 16 MiB, safe on v5e/v6e/v7x with a
                                # 32 MiB scoped-VMEM limit.


def _lane_dense_layout(total, itemsize):
    """Factor `total` into (rows, cols): cols a wide multiple of 128, rows >= sublane."""
    sub = 8 * max(1, 4 // itemsize)  # 8 rows f32 / 16 bf16 / 32 int8 per vreg
    for cols in (8192, 4096, 2048, 1024, 512, 256, 128):
        if total % cols == 0 and (total // cols) >= sub:
            return total // cols, cols
    return None


def _largest_divisor_at_most(n, cap, multiple):
    """Largest divisor of n that is <= cap and a multiple of `multiple` (or None)."""
    best = None
    d = multiple
    top = min(n, cap)
    while d <= top:
        if n % d == 0:
            best = d
        d += multiple
    return best


def _streaming_copy(x, *, small_bytes=_SMALL_BYTES,
                    target_tile_bytes=_TARGET_TILE_BYTES):
    """HBM-aliased identity copy of x (same shape out)."""
    total = x.size
    itemsize = x.dtype.itemsize
    nbytes = total * itemsize
    layout = _lane_dense_layout(total, itemsize)

    if layout is None or nbytes <= small_bytes:
        # Single full-array block: one DMA pair, no per-grid-step overhead
        # (last dims == full array dims satisfy the (8,128) rule).
        # TODO(synk): a huge input whose element count is not a multiple of
        # 128 would not fit one VMEM block; not a case this module produces.
        slab = x if layout is None else jnp.reshape(x, layout)
        out = pl.pallas_call(
            _copy_kernel,
            out_shape=jax.ShapeDtypeStruct(slab.shape, slab.dtype),
            input_output_aliases={0: 0},
        )(slab)
        return jnp.reshape(out, x.shape)

    rows, cols = layout
    slab = jnp.reshape(x, (rows, cols))   # metadata-only
    sub = 8 * max(1, 4 // itemsize)
    target_rows = max(sub, target_tile_bytes // (cols * itemsize))
    tile_rows = _largest_divisor_at_most(rows, target_rows, sub)
    if tile_rows is None:
        # No clean divisor: accept a masked final block.
        tile_rows = min(rows, max(sub, (target_rows // sub) * sub))
    grid = (pl.cdiv(rows, tile_rows),)

    out = pl.pallas_call(
        _copy_kernel,
        out_shape=jax.ShapeDtypeStruct((rows, cols), slab.dtype),
        grid_spec=pltpu.PrefetchScalarGridSpec(
            num_scalar_prefetch=0,
            grid=grid,
            in_specs=[pl.BlockSpec((tile_rows, cols), lambda i: (i, 0))],
            out_specs=pl.BlockSpec((tile_rows, cols), lambda i: (i, 0)),
        ),
        compiler_params=pltpu.CompilerParams(
            dimension_semantics=("parallel",),
            vmem_limit_bytes=32 << 20,
        ),
        input_output_aliases={0: 0},
    )(slab)
    return jnp.reshape(out, x.shape)


# ---------------------------------------------------------------------------
# One-time probe (eager, at import): does the zero-DMA path lower & run?
# ---------------------------------------------------------------------------
def _probe_zero_dma():
    try:
        x = jnp.arange(8 * 128, dtype=jnp.float32).reshape(8, 128)
        y = jax.block_until_ready(jax.jit(_alias_passthrough)(x))
        return bool(jnp.array_equal(x, y))
    except Exception:
        return False


_ZERO_DMA_OK = _probe_zero_dma()


# ---------------------------------------------------------------------------
# Public forward: Pallas equivalent of torch `x.view(-1, dim, 1, 1)`.
# ---------------------------------------------------------------------------
def reshape1d_forward(x, dim):
    total = x.size
    assert total % dim == 0, "element count must be divisible by dim"
    b = total // dim
    # NOTE: for true zero-copy in a larger program, donate `x` at the jit
    # boundary (jax.jit(..., donate_argnums=0)); otherwise XLA protects the
    # still-live input with one defensive copy before the aliased call.
    out = _alias_passthrough(x) if _ZERO_DMA_OK else _streaming_copy(x)
    return jnp.reshape(out, (b, dim, 1, 1))   # metadata-only glue reshape


if __name__ == "__main__":
    key = jax.random.PRNGKey(0)
    k1, k2, k3 = jax.random.split(key, 3)

    # Constructor args of reshape1D: img_dim is unused; y_logvar_dim = dim.
    y_logvar_dim = 32

    fwd = jax.jit(reshape1d_forward, static_argnums=(1,))

    # Case 1: module-typical tiny input (batch=2, hidden=32).
    x1 = jax.random.normal(k1, (2, y_logvar_dim), dtype=jnp.float32)
    o1 = jax.block_until_ready(fwd(x1, y_logvar_dim))
    r1 = jnp.reshape(x1, (-1, y_logvar_dim, 1, 1))
    assert o1.shape == (2, y_logvar_dim, 1, 1) and o1.dtype == x1.dtype
    assert bool(jnp.array_equal(o1, r1))

    # Case 2: 128-multiple element count (batch=8, hidden=128).
    x2 = jax.random.normal(k2, (8, 128), dtype=jnp.float32)
    o2 = jax.block_until_ready(fwd(x2, 128))
    r2 = jnp.reshape(x2, (-1, 128, 1, 1))
    assert o2.shape == (8, 128, 1, 1) and o2.dtype == x2.dtype
    assert bool(jnp.array_equal(o2, r2))

    # Case 3: explicitly exercise the streaming-copy fallback (lane-dense
    # slab, real multi-step grid with divisor-sized, unmasked tiles), even
    # when the zero-DMA path is the one used by the forward.
    x3 = jax.random.normal(k3, (256, 1024), dtype=jnp.float32)   # 1 MiB
    o3 = jax.block_until_ready(
        jax.jit(lambda a: _streaming_copy(
            a, small_bytes=0, target_tile_bytes=64 << 10))(x3))
    assert o3.shape == x3.shape and o3.dtype == x3.dtype
    assert bool(jnp.array_equal(o3, x3))

    print("KERNEL_OK")
</pallas_src>

<mosaic_0001>
module attributes {stable_mosaic.version = 11 : i64} {
  func.func @_touch_kernel(%arg0: memref<8x128xf32, #tpu.memory_space<any>>, %arg1: memref<8x128xf32, #tpu.memory_space<any>>) attributes {dimension_semantics = [], scalar_prefetch = 0 : i64, scratch_operands = 0 : i64, tpu.core_type = #tpu.core_type<tc>} {
    return
  }
}

module attributes {stable_mosaic.version = 11 : i64} {
  func.func @_copy_kernel(%arg0: memref<2x32xf32, #tpu.memory_space<vmem>>, %arg1: memref<2x32xf32, #tpu.memory_space<vmem>>) attributes {dimension_semantics = [], scalar_prefetch = 0 : i64, scratch_operands = 0 : i64, tpu.core_type = #tpu.core_type<tc>} {
    %c0 = arith.constant 0 : index
    %c0_0 = arith.constant 0 : index
    %0 = vector.load %arg0[%c0, %c0_0] : memref<2x32xf32, #tpu.memory_space<vmem>>, vector<2x32xf32>
    %c0_1 = arith.constant 0 : index
    %c0_2 = arith.constant 0 : index
    %1 = vector.load %arg1[%c0_1, %c0_2] : memref<2x32xf32, #tpu.memory_space<vmem>>, vector<2x32xf32>
    tpu.vector_store %arg1[%c0_1, %c0_2], %0 {strides = array<i32>} : memref<2x32xf32, #tpu.memory_space<vmem>>, vector<2x32xf32>,
    return
  }
}

</mosaic_0001>

<llo_original>
// kernel: _alias_passthrough.1
$region0: #{_alias_passthrough.1}
  #allocation0 [shape = 'u32[]', space=smem, size = 0x4, offset = 0x4, fixed_abs, tag = 'smem constant byte address 0x4 - core index']
  #allocation1 [shape = 'u32[72,128]{1,0:T(1,128)}', space=vmem, size = 0x9000, scoped, tag = 'internal scratch']
  %s0 = inlined_call_operand.hbm [shape: f32[8,128], index: 0, kind: input, shape index: {}, may-alias: {0,1}]
  %s1 = inlined_call_operand.hbm [shape: f32[8,128], index: 1, kind: output, shape index: {}, may-alias: {0,1}]
  %s2 = sld [smem:[#allocation0]]
  $region2: #{_alias_passthrough.1} parent=0
    _
  %s4 = ssub.s32 1, %s2
  %s5 = scalar_select 0, %s4, %s2

// kernel: reshape1d_forward.1
$region0: #{reshape1d_forward.1}
  #allocation0 [shape = 'u32[]', space=smem, size = 0x4, offset = 0x4, fixed_abs, tag = 'smem constant byte address 0x4 - core index']
  #allocation1 [shape = 'u32[72,128]{1,0:T(1,128)}', space=vmem, size = 0x9000, scoped, tag = 'internal scratch']
  %s0 = inlined_call_operand.vmem [shape: f32[2,32], index: 0, kind: input, shape index: {}, may-alias: {0,1}]
  %s1 = inlined_call_operand.vmem [shape: f32[2,32], index: 1, kind: output, shape index: {}, may-alias: {0,1}]
  %s2 = sld [smem:[#allocation0]]
  $region14: #{reshape1d_forward.1} parent=0
    _
  %s4 = ssub.s32 1, %s2
  %s5 = scalar_select 0, %s4, %s2
  // Predicated region
  $region2: #{reshape1d_forward.1} parent=0 // pred_check
    _
  $region3: #{reshape1d_forward.1} parent=0 // pred_check_branch
    %7 = sbr.rel (0) target = $region5
  $region4: #{reshape1d_forward.1} parent=0 // pred_region
    _
  $region5: #{reshape1d_forward.1} parent=0 // pred_fallthru
    _
  %v8 = vld [vmem:[%s0] sm:$0x3]
  %vm9 = vcmask 254976
  %10 = vst.msk [vmem:[%s1] sm:$0x3] %vm9, %v8
  // Predicated region
  $region6: #{reshape1d_forward.1} parent=0 // pred_check
    _
  $region7: #{reshape1d_forward.1} parent=0 // pred_check_branch
    %12 = sbr.rel (0) target = $region9
  $region8: #{reshape1d_forward.1} parent=0 // pred_region
    _
  $region9: #{reshape1d_forward.1} parent=0 // pred_fallthru
    _
  // Predicated region
  $region10: #{reshape1d_forward.1} parent=0 // pred_check
    _
  $region11: #{reshape1d_forward.1} parent=0 // pred_check_branch
    %14 = sbr.rel (0) target = $region13
  $region12: #{reshape1d_forward.1} parent=0 // pred_region
    _
  $region13: #{reshape1d_forward.1} parent=0 // pred_fallthru
    _

</llo_original>
